<compile_context>
chip_gen: v7x
topology: tpu7x:2x2x1
jax: 0.10.0
libtpu: 0.0.40
codegen_flags: <defaults>
</compile_context>

<pallas_src>
import functools

import jax
import jax.numpy as jnp
from jax import lax
from jax.experimental import pallas as pl
from jax.experimental.pallas import tpu as pltpu


def _masked_bce_hnm_dice_kernel(k_ref, x_ref, t_ref, out_ref, *, S, R, ignore_index):
    """One grid step == one (sample n, channel c) pair.
       k_ref  : SMEM (C,) int32   per-channel top-k counts (scalar prefetch)
       x_ref  : (1, 1, R, 128)    logits, native dtype (S = D*H*W lane-padded)
       t_ref  : (1, 1, R, 128)    targets, native dtype
       out_ref: (1, 1, 8, 128)    lane-wise partial stats for this (n, c)
    """
    x = x_ref[0, 0].astype(jnp.float32)        # (R, 128)
    t = t_ref[0, 0].astype(jnp.float32)

    # ---- _MaskingLossWrapper: zero input & target where target == ignore_index ----
    keep = t != ignore_index
    x = jnp.where(keep, x, 0.0)
    t = jnp.where(keep, t, 0.0)

    # ---- BCE-with-logits + sigmoid, sharing one EUP exp per element ----
    e = jnp.exp(-jnp.abs(x))                   # in (0, 1]
    inv_1pe = 1.0 / (1.0 + e)                  # exact (approx vrcp biased dice sums)
    bce = jnp.maximum(x, 0.0) - x * t + jnp.log(1.0 + e)
    sig = jnp.where(x >= 0.0, inv_1pe, e * inv_1pe)     # == sigmoid(x)

    # Lane padding (flattened index >= S) must contribute nothing: x == t == 0
    # there already, so only sigmoid(0) = 0.5 needs masking.
    if R * 128 != S:
        lin = (lax.broadcasted_iota(jnp.int32, (R, 128), 0) * 128
               + lax.broadcasted_iota(jnp.int32, (R, 128), 1))
        sig = jnp.where(lin < S, sig, 0.0)

    # ---- sublane reductions on the otherwise-idle MXU: ones(1, R) @ block ----
    ones_row = jnp.ones((1, R), jnp.float32)

    def row_sum(v):                            # (R, 128) -> (1, 128)
        return jnp.dot(ones_row, v, preferred_element_type=jnp.float32)

    inter_l = row_sum(sig * t)                 # dice numerator partials
    ssum_l = row_sum(sig * sig)
    tsum_l = row_sum(t * t)

    # ---- exact top-k threshold via bit-space bisection ----
    # loss >= 0 and finite => its f32 bit pattern (as int32) is monotone in value.
    # Only lb (int32 bits) is carried across the loop.
    loss = t * bce
    lb = lax.bitcast_convert_type(loss, jnp.int32)
    k_f = k_ref[pl.program_id(1)].astype(jnp.float32)

    def bisect(_, carry):
        lo, hi = carry
        mid = lo + jnp.right_shift(hi - lo, 1)
        cnt = jnp.sum(row_sum((lb >= mid).astype(jnp.float32)))   # MXU + lane reduce
        take = cnt >= k_f
        return jnp.where(take, mid, lo), jnp.where(take, hi, mid)

    lo, _ = lax.fori_loop(0, 32, bisect,
                          (jnp.int32(0), jnp.int32(0x7F800000)))  # [0, bits(+inf))

    # lo == bits of the k-th largest loss value; fused post-loop sweep.
    loss_v = lax.bitcast_convert_type(lb, jnp.float32)            # free, exact
    gt = lb > lo
    sum_gt_l = row_sum(jnp.where(gt, loss_v, 0.0))                # (1, 128)
    cnt_gt_l = row_sum(gt.astype(jnp.float32))                    # (1, 128)
    thr_row = lax.bitcast_convert_type(jnp.broadcast_to(lo, (1, 128)), jnp.float32)

    # ---- single unmasked (8, 128) store of the per-(n, c) stats block ----
    out_ref[0, 0] = jnp.concatenate(
        [inter_l, ssum_l, tsum_l, sum_gt_l, cnt_gt_l, thr_row,
         jnp.zeros((2, 128), jnp.float32)], axis=0)


def masked_bce_hnm_dice_loss(x, t, *, ignore_index, alpha, beta,
                             k=60, ratio=(0.5, 0.5), eps=1e-6):
    """_MaskingLossWrapper(loss=BCE+HNM+Dice, ignore_index) forward, fused."""
    N, C, D, H, W = x.shape
    assert t.shape == x.shape, "'input' and 'target' must have the same shape"
    assert C == len(ratio), "ratio should have same dimension as C"
    S = D * H * W
    R = pl.cdiv(S, 128)
    S_pad = R * 128

    # Native dtype straight into the kernel; the f32 cast happens after the DMA.
    xf = x.reshape(N, C, S)
    tf = t.reshape(N, C, S)
    if S_pad != S:
        pad = ((0, 0), (0, 0), (0, S_pad - S))
        xf = jnp.pad(xf, pad)                  # zero padding, masked in the kernel
        tf = jnp.pad(tf, pad)
    xf = xf.reshape(N, C, R, 128)              # lane-dense: R sublanes x 128 lanes
    tf = tf.reshape(N, C, R, 128)

    # round(ratio[i] * k) like the PyTorch module; clamp to S like slicing would.
    k_per_channel = tuple(min(int(round(ratio[i] * k)), S) for i in range(C))
    k_smem = jnp.asarray(k_per_channel, dtype=jnp.int32)

    kernel = functools.partial(_masked_bce_hnm_dice_kernel,
                               S=S, R=R, ignore_index=float(ignore_index))

    # Live set per step: lb + a handful of (R,128) f32 intermediates before the
    # loop, plus double-buffered native-dtype input blocks.
    work_bytes = R * 128 * 4
    in_bytes = R * 128 * (xf.dtype.itemsize + tf.dtype.itemsize)
    try:
        vmem_cap = int(pltpu.get_tpu_info().vmem_capacity_bytes)
    except Exception:
        vmem_cap = 64 << 20                    # conservative v7x fallback
    vmem_limit = int(min(max(8 * work_bytes + 4 * in_bytes + (4 << 20), 32 << 20),
                         (vmem_cap * 7) // 8))

    # TODO(synk): for volumes where one (R, 128) channel block exceeds per-core
    # VMEM (v7x: 64 MiB), add a third "arbitrary" S-tile grid axis with a
    # streaming bit-histogram top-k; currently one (n, c) block stays resident.
    stats = pl.pallas_call(
        kernel,
        out_shape=jax.ShapeDtypeStruct((N, C, 8, 128), jnp.float32),
        grid_spec=pltpu.PrefetchScalarGridSpec(
            num_scalar_prefetch=1,
            grid=(N, C),
            in_specs=[pl.BlockSpec((1, 1, R, 128), lambda n, c, kref: (n, c, 0, 0)),
                      pl.BlockSpec((1, 1, R, 128), lambda n, c, kref: (n, c, 0, 0))],
            out_specs=pl.BlockSpec((1, 1, 8, 128), lambda n, c, kref: (n, c, 0, 0))),
        compiler_params=pltpu.CompilerParams(
            dimension_semantics=("parallel", "parallel"),   # N*C units for megacore
            vmem_limit_bytes=vmem_limit),
    )(k_smem, xf, tf)

    # ---- tiny combine in plain JAX ----
    inter = stats[:, :, 0, :].sum(axis=(0, 2))             # (C,)
    ssum = stats[:, :, 1, :].sum(axis=(0, 2))               # (C,)
    tsum = stats[:, :, 2, :].sum(axis=(0, 2))               # (C,)
    sum_gt = stats[:, :, 3, :].sum(axis=2)                  # (N, C)
    cnt_gt = stats[:, :, 4, :].sum(axis=2)                  # (N, C)
    thr = stats[:, :, 5, 0]                                 # (N, C)

    k_arr = jnp.asarray(k_per_channel, dtype=jnp.float32)[None, :]
    bce_hnm = (sum_gt + (k_arr - cnt_gt) * thr).sum()       # exact top-k sums

    dcc = 2.0 * inter / jnp.maximum(ssum + tsum, eps)
    dice_loss = 1.0 - jnp.mean(1.0 - dcc)   # module's double inversion, kept as-is
    return alpha * bce_hnm + beta * dice_loss


def _reference(x, t, *, ignore_index, alpha, beta, k=60, ratio=(0.5, 0.5), eps=1e-6):
    """Pure-JAX reference mirroring _MaskingLossWrapper(BCE+HNM+Dice)."""
    N, C = x.shape[:2]
    xf = x.reshape(N, C, -1).astype(jnp.float32)
    tf = t.reshape(N, C, -1).astype(jnp.float32)
    mask = (tf != ignore_index).astype(jnp.float32)
    xf = xf * mask
    tf = tf * mask
    bce = jnp.maximum(xf, 0.0) - xf * tf + jnp.log1p(jnp.exp(-jnp.abs(xf)))
    loss = tf * bce
    loss_sort = -jnp.sort(-loss, axis=2)                    # descending
    bce_hnm = jnp.float32(0.0)
    for i in range(C):
        ki = min(int(round(ratio[i] * k)), loss.shape[2])
        bce_hnm = bce_hnm + loss_sort[:, i, :ki].sum()
    sig = 1.0 / (1.0 + jnp.exp(-xf))
    si = jnp.transpose(sig, (1, 0, 2)).reshape(C, -1)
    ti = jnp.transpose(tf, (1, 0, 2)).reshape(C, -1)
    inter = (si * ti).sum(-1)
    den = jnp.maximum((si * si).sum(-1) + (ti * ti).sum(-1), eps)
    dcc = 2.0 * inter / den
    dice_loss = 1.0 - jnp.mean(1.0 - dcc)
    return alpha * bce_hnm + beta * dice_loss


if __name__ == "__main__":
    key = jax.random.PRNGKey(0)
    kx, kt, ki = jax.random.split(key, 3)

    # small [N, C, D, H, W] example; S = 1001 exercises lane padding, C == len(ratio)
    N, C, D, H, W = 2, 2, 7, 11, 13
    ignore_index = -1.0
    alpha, beta = 0.7, 0.3

    x = jax.random.normal(kx, (N, C, D, H, W), dtype=jnp.float32) * 2.0
    t01 = jax.random.bernoulli(kt, 0.3, (N, C, D, H, W)).astype(jnp.float32)
    ign = jax.random.bernoulli(ki, 0.15, (N, C, D, H, W))
    t = jnp.where(ign, jnp.float32(ignore_index), t01)

    out = masked_bce_hnm_dice_loss(x, t, ignore_index=ignore_index,
                                   alpha=alpha, beta=beta, k=60, ratio=(0.5, 0.5))
    out = jax.block_until_ready(out)

    ref = _reference(x, t, ignore_index=ignore_index, alpha=alpha, beta=beta,
                     k=60, ratio=(0.5, 0.5))
    assert jnp.allclose(out, ref, rtol=1e-2, atol=1e-2), (out, ref)

    print("KERNEL_OK")
</pallas_src>

<mosaic_0001>
module attributes {stable_mosaic.version = 11 : i64} {
  func.func @_masked_bce_hnm_dice_kernel(%arg0: i32, %arg1: i32, %arg2: memref<2xi32, #tpu.memory_space<smem>>, %arg3: memref<1x1x8x128xf32, #tpu.memory_space<vmem>>, %arg4: memref<1x1x8x128xf32, #tpu.memory_space<vmem>>, %arg5: memref<1x1x8x128xf32, #tpu.memory_space<vmem>>) attributes {dimension_semantics = [#tpu.dimension_semantics<parallel>, #tpu.dimension_semantics<parallel>], iteration_bounds = array<i64: 2, 2>, scalar_prefetch = 1 : i64, scratch_operands = 0 : i64, tpu.core_type = #tpu.core_type<tc>, window_params = [{transform_indices = @transform_0, window_bounds = array<i64: 1, 1, 8, 128>}, {transform_indices = @transform_1, window_bounds = array<i64: 1, 1, 8, 128>}, {transform_indices = @transform_2, window_bounds = array<i64: 1, 1, 8, 128>}]} {
    %c0 = arith.constant 0 : index
    %c0_0 = arith.constant 0 : index
    %c0_1 = arith.constant 0 : index
    %c0_2 = arith.constant 0 : index
    %0 = vector.load %arg3[%c0, %c0_0, %c0_1, %c0_2] : memref<1x1x8x128xf32, #tpu.memory_space<vmem>>, vector<1x1x8x128xf32>
    %1 = vector.shape_cast %0 : vector<1x1x8x128xf32> to vector<8x128xf32>
    %c0_3 = arith.constant 0 : index
    %c0_4 = arith.constant 0 : index
    %c0_5 = arith.constant 0 : index
    %c0_6 = arith.constant 0 : index
    %2 = vector.load %arg4[%c0_3, %c0_4, %c0_5, %c0_6] : memref<1x1x8x128xf32, #tpu.memory_space<vmem>>, vector<1x1x8x128xf32>
    %3 = vector.shape_cast %2 : vector<1x1x8x128xf32> to vector<8x128xf32>
    %cst = arith.constant -1.000000e+00 : f32
    %4 = vector.broadcast %cst : f32 to vector<8x128xf32>
    %5 = arith.cmpf one, %3, %4 : vector<8x128xf32>
    %cst_7 = arith.constant 0.000000e+00 : f32
    %6 = vector.broadcast %cst_7 : f32 to vector<8x128xf32>
    %7 = arith.select %5, %1, %6 : vector<8x128xi1>, vector<8x128xf32>
    %cst_8 = arith.constant 0.000000e+00 : f32
    %8 = vector.broadcast %cst_8 : f32 to vector<8x128xf32>
    %9 = arith.select %5, %3, %8 : vector<8x128xi1>, vector<8x128xf32>
    %10 = math.absf %7 : vector<8x128xf32>
    %cst_9 = arith.constant 0.000000e+00 : f32
    %11 = vector.broadcast %cst_9 : f32 to vector<8x128xf32>
    %12 = arith.subf %11, %10 : vector<8x128xf32>
    %13 = math.exp %12 : vector<8x128xf32>
    %cst_10 = arith.constant 1.000000e+00 : f32
    %14 = vector.broadcast %cst_10 : f32 to vector<8x128xf32>
    %15 = arith.addf %14, %13 : vector<8x128xf32>
    %cst_11 = arith.constant 1.000000e+00 : f32
    %16 = vector.broadcast %cst_11 : f32 to vector<8x128xf32>
    %17 = arith.divf %16, %15 : vector<8x128xf32>
    %cst_12 = arith.constant 0.000000e+00 : f32
    %18 = vector.broadcast %cst_12 : f32 to vector<8x128xf32>
    %19 = arith.maximumf %7, %18 : vector<8x128xf32>
    %20 = arith.mulf %7, %9 : vector<8x128xf32>
    %21 = arith.subf %19, %20 : vector<8x128xf32>
    %cst_13 = arith.constant 1.000000e+00 : f32
    %22 = vector.broadcast %cst_13 : f32 to vector<8x128xf32>
    %23 = arith.addf %22, %13 : vector<8x128xf32>
    %24 = math.log %23 : vector<8x128xf32>
    %25 = arith.addf %21, %24 : vector<8x128xf32>
    %cst_14 = arith.constant 0.000000e+00 : f32
    %26 = vector.broadcast %cst_14 : f32 to vector<8x128xf32>
    %27 = arith.cmpf oge, %7, %26 : vector<8x128xf32>
    %28 = arith.mulf %13, %17 : vector<8x128xf32>
    %29 = arith.select %27, %17, %28 : vector<8x128xi1>, vector<8x128xf32>
    %30 = tpu.iota {dimensions = array<i32: 0>} : vector<8x128xi32>
    %c128_i32 = arith.constant 128 : i32
    %31 = vector.broadcast %c128_i32 : i32 to vector<8x128xi32>
    %32 = arith.muli %30, %31 : vector<8x128xi32>
    %33 = tpu.iota {dimensions = array<i32: 1>} : vector<8x128xi32>
    %34 = arith.addi %32, %33 : vector<8x128xi32>
    %c1001_i32 = arith.constant 1001 : i32
    %35 = vector.broadcast %c1001_i32 : i32 to vector<8x128xi32>
    %36 = arith.cmpi slt, %34, %35 : vector<8x128xi32>
    %cst_15 = arith.constant 0.000000e+00 : f32
    %37 = vector.broadcast %cst_15 : f32 to vector<8x128xf32>
    %38 = arith.select %36, %29, %37 : vector<8x128xi1>, vector<8x128xf32>
    %cst_16 = arith.constant 1.000000e+00 : f32
    %39 = vector.broadcast %cst_16 : f32 to vector<1x8xf32>
    %40 = arith.mulf %38, %9 : vector<8x128xf32>
    %cst_17 = arith.constant dense<0.000000e+00> : vector<1x128xf32>
    %41 = tpu.matmul %39, %40, %cst_17 {dimension_numbers = #tpu.dot_dimension_numbers<[1], [0], [0], [1], [0, 0, 1, 1], [], []>} : vector<1x8xf32>, vector<8x128xf32>, vector<1x128xf32> -> vector<1x128xf32>
    %42 = arith.mulf %38, %38 : vector<8x128xf32>
    %cst_18 = arith.constant dense<0.000000e+00> : vector<1x128xf32>
    %43 = tpu.matmul %39, %42, %cst_18 {dimension_numbers = #tpu.dot_dimension_numbers<[1], [0], [0], [1], [0, 0, 1, 1], [], []>} : vector<1x8xf32>, vector<8x128xf32>, vector<1x128xf32> -> vector<1x128xf32>
    %44 = arith.mulf %9, %9 : vector<8x128xf32>
    %cst_19 = arith.constant dense<0.000000e+00> : vector<1x128xf32>
    %45 = tpu.matmul %39, %44, %cst_19 {dimension_numbers = #tpu.dot_dimension_numbers<[1], [0], [0], [1], [0, 0, 1, 1], [], []>} : vector<1x8xf32>, vector<8x128xf32>, vector<1x128xf32> -> vector<1x128xf32>
    %46 = arith.mulf %9, %25 : vector<8x128xf32>
    %47 = tpu.bitcast %46 : vector<8x128xf32> -> vector<8x128xi32>
    %48 = arith.index_cast %arg1 : i32 to index
    %49 = memref.load %arg2[%48] : memref<2xi32, #tpu.memory_space<smem>>
    %50 = arith.sitofp %49 : i32 to f32
    %c0_i32 = arith.constant 0 : i32
    %c2139095040_i32 = arith.constant 2139095040 : i32
    %c0_i32_20 = arith.constant 0 : i32
    %c32_i32 = arith.constant 32 : i32
    %51 = arith.addi %c0_i32_20, %c32_i32 : i32
    %c1_i32 = arith.constant 1 : i32
    %52:2 = scf.for %arg6 = %c0_i32_20 to %51 step %c1_i32 iter_args(%arg7 = %c0_i32, %arg8 = %c2139095040_i32) -> (i32, i32)  : i32 {
      %69 = arith.subi %arg8, %arg7 : i32
      %c1_i32_29 = arith.constant 1 : i32
      %70 = arith.shrsi %69, %c1_i32_29 : i32
      %71 = arith.addi %arg7, %70 : i32
      %72 = vector.broadcast %71 : i32 to vector<8x128xi32>
      %73 = arith.cmpi sge, %47, %72 : vector<8x128xi32>
      %74 = arith.extui %73 : vector<8x128xi1> to vector<8x128xi32>
      %75 = arith.sitofp %74 : vector<8x128xi32> to vector<8x128xf32>
      %cst_30 = arith.constant dense<0.000000e+00> : vector<1x128xf32>
      %76 = tpu.matmul %39, %75, %cst_30 {dimension_numbers = #tpu.dot_dimension_numbers<[1], [0], [0], [1], [0, 0, 1, 1], [], []>} : vector<1x8xf32>, vector<8x128xf32>, vector<1x128xf32> -> vector<1x128xf32>
      %77 = vector.shape_cast %76 : vector<1x128xf32> to vector<1x1x128xf32>
      %cst_31 = arith.constant dense<0.000000e+00> : vector<1xf32>
      %78 = vector.multi_reduction <add>, %77, %cst_31 [1, 2] : vector<1x1x128xf32> to vector<1xf32>
      %79 = vector.shape_cast %78 : vector<1xf32> to vector<1x1x1xf32>
      %80 = vector.extract %79[0, 0, 0] : f32 from vector<1x1x1xf32>
      %81 = arith.cmpf oge, %80, %50 : f32
      %82 = arith.select %81, %71, %arg7 : i32
      %83 = arith.select %81, %arg8, %71 : i32
      scf.yield %82, %83 : i32, i32
    }
    %53 = tpu.bitcast %47 : vector<8x128xi32> -> vector<8x128xf32>
    %54 = vector.broadcast %52#0 : i32 to vector<8x128xi32>
    %55 = arith.cmpi sgt, %47, %54 : vector<8x128xi32>
    %cst_21 = arith.constant 0.000000e+00 : f32
    %56 = vector.broadcast %cst_21 : f32 to vector<8x128xf32>
    %57 = arith.select %55, %53, %56 : vector<8x128xi1>, vector<8x128xf32>
    %cst_22 = arith.constant dense<0.000000e+00> : vector<1x128xf32>
    %58 = tpu.matmul %39, %57, %cst_22 {dimension_numbers = #tpu.dot_dimension_numbers<[1], [0], [0], [1], [0, 0, 1, 1], [], []>} : vector<1x8xf32>, vector<8x128xf32>, vector<1x128xf32> -> vector<1x128xf32>
    %59 = arith.extui %55 : vector<8x128xi1> to vector<8x128xi32>
    %60 = arith.sitofp %59 : vector<8x128xi32> to vector<8x128xf32>
    %cst_23 = arith.constant dense<0.000000e+00> : vector<1x128xf32>
    %61 = tpu.matmul %39, %60, %cst_23 {dimension_numbers = #tpu.dot_dimension_numbers<[1], [0], [0], [1], [0, 0, 1, 1], [], []>} : vector<1x8xf32>, vector<8x128xf32>, vector<1x128xf32> -> vector<1x128xf32>
    %62 = vector.broadcast %52#0 : i32 to vector<1x128xi32>
    %63 = tpu.bitcast %62 : vector<1x128xi32> -> vector<1x128xf32>
    %cst_24 = arith.constant 0.000000e+00 : f32
    %64 = vector.broadcast %cst_24 : f32 to vector<2x128xf32>
    %65 = tpu.concatenate %41, %43, %45, %58, %61, %63, %64 in 0 : vector<1x128xf32>, vector<1x128xf32>, vector<1x128xf32>, vector<1x128xf32>, vector<1x128xf32>, vector<1x128xf32>, vector<2x128xf32> -> vector<8x128xf32>
    %c0_25 = arith.constant 0 : index
    %c0_26 = arith.constant 0 : index
    %c0_27 = arith.constant 0 : index
    %c0_28 = arith.constant 0 : index
    %66 = vector.load %arg5[%c0_25, %c0_26, %c0_27, %c0_28] : memref<1x1x8x128xf32, #tpu.memory_space<vmem>>, vector<1x1x8x128xf32>
    %67 = vector.shape_cast %66 : vector<1x1x8x128xf32> to vector<8x128xf32>
    %68 = vector.shape_cast %65 : vector<8x128xf32> to vector<1x1x8x128xf32>
    tpu.vector_store %arg5[%c0_25, %c0_26, %c0_27, %c0_28], %68 {strides = array<i32>} : memref<1x1x8x128xf32, #tpu.memory_space<vmem>>, vector<1x1x8x128xf32>,
    return
  }
  func.func @transform_0(%arg0: i32, %arg1: i32, %arg2: memref<2xi32, #tpu.memory_space<smem>>) -> (i32, i32, i32, i32) {
    %c0_i32 = arith.constant 0 : i32
    %c0_i32_0 = arith.constant 0 : i32
    %c0_i32_1 = arith.constant 0 : i32
    return %arg0, %arg1, %c0_i32, %c0_i32_0 : i32, i32, i32, i32
  }
  func.func @transform_1(%arg0: i32, %arg1: i32, %arg2: memref<2xi32, #tpu.memory_space<smem>>) -> (i32, i32, i32, i32) {
    %c0_i32 = arith.constant 0 : i32
    %c0_i32_0 = arith.constant 0 : i32
    %c0_i32_1 = arith.constant 0 : i32
    return %arg0, %arg1, %c0_i32, %c0_i32_0 : i32, i32, i32, i32
  }
  func.func @transform_2(%arg0: i32, %arg1: i32, %arg2: memref<2xi32, #tpu.memory_space<smem>>) -> (i32, i32, i32, i32) {
    %c0_i32 = arith.constant 0 : i32
    %c0_i32_0 = arith.constant 0 : i32
    %c0_i32_1 = arith.constant 0 : i32
    return %arg0, %arg1, %c0_i32, %c0_i32_0 : i32, i32, i32, i32
  }
}

</mosaic_0001>

<llo_original>
// kernel: tpu_custom_call.1
$region0: #{tpu_custom_call.1}
  #allocation0 [shape = 'u32[]', space=smem, size = 0x4, offset = 0x4, fixed_abs, tag = 'smem constant byte address 0x4 - core index']
  #allocation1 [shape = 'u32[144,128]{1,0:T(1,128)}', space=vmem, size = 0x12000, scoped, tag = 'internal scratch']
  #allocation2 [shape = 's32[1]{0}', space=sflag, size = 0x4, scoped, tag = 'scoped memory for tpu_custom_call.1']
  #allocation3 [shape = 'u8[512]{0}', space=smem, size = 0x200, scoped, tag = 'prefetched SMEM operand 0']
  %s0 = inlined_call_operand.hbm [shape: s32[2], index: 0, kind: input, shape index: {}]
  %s1 = inlined_call_operand.hbm [shape: f32[2,2,8,128], index: 1, kind: input, shape index: {}]
  %s2 = inlined_call_operand.hbm [shape: f32[2,2,8,128], index: 2, kind: input, shape index: {}]
  %s3 = inlined_call_operand.hbm [shape: f32[2,2,8,128], index: 3, kind: output, shape index: {}]
  %s4 = sld [smem:[#allocation0]]
  $region56: #{tpu_custom_call.1} parent=0
    _
  %s6 = ssub.s32 1, %s4
  %s7 = scalar_select 0, %s6, %s4
  %9 = dma.hbm_to_smem %s0, 16, [#allocation3], [#allocation2]
  %10 = dma.done [#allocation2], 16
  %11 = sfence
  $region1: #{tpu_custom_call.1} parent=0
    #allocation4 [shape = 'u8[8192]{0}', space=vmem, size = 0x2000, scoped, tag = 'input window, operand 1']
    #allocation5 [shape = 's32[2]{0}', space=sflag, size = 0x8, scoped, tag = 'scoped memory for tpu_custom_call.1']
    #allocation6 [shape = 's32[2]{0}', space=sflag, size = 0x8, scoped, tag = 'scoped memory for tpu_custom_call.1']
    #allocation7 [shape = 'u8[8192]{0}', space=vmem, size = 0x2000, scoped, tag = 'input window, operand 2']
    #allocation8 [shape = 's32[2]{0}', space=sflag, size = 0x8, scoped, tag = 'scoped memory for tpu_custom_call.1']
    #allocation9 [shape = 'u8[8192]{0}', space=vmem, size = 0x2000, scoped, tag = 'output window, operand 0']
    %12 = vsyncpa [#allocation5], 0
    %s13 = scalar_lea.sflag [#allocation5], 1
    %14 = vsyncpa %s13, 0
    %15 = vsyncpa [#allocation8], 0
    %s16 = scalar_lea.sflag [#allocation8], 1
    %17 = vsyncpa %s16, 0
    %18 = vsyncpa [#allocation6], 0
    %s19 = scalar_lea.sflag [#allocation6], 1
    %20 = vsyncpa %s19, 0
    loop: start=0, step=1, limit=6
    $region2: #{tpu_custom_call.1} parent=1 // loop_pre_header
      _
    $region3: #{tpu_custom_call.1} parent=1 // loop_header
      %s22 = sphi 0, %s26
      %p23 = scmp.ge.s32.totalorder %s22, 6
      %s29 = sphi 0, %s41
      %s30 = sphi 0, %s37
      %s31 = sphi 0, %s29
      %s32 = sphi 0, %s30
      %s33 = sphi 0, %s31
      %s34 = sphi 0, %s32
      %s46 = sphi 0, %s48
      %s49 = sphi 0, %s46
      %s50 = sphi 0, %s49
      %s66 = sphi 0, %s50
      %s74 = sphi 0, %s76
      %s77 = sphi 0, %s74
      %s78 = sphi 0, %s77
      %s94 = sphi 0, %s78
      %s102 = sphi 0, %s104
      %s105 = sphi 0, %s102
      %s106 = sphi 0, %s105
      %s122 = sphi 0, %s106
    $region4: #{tpu_custom_call.1} parent=1 // loop_header_branch
      %25 = sbr.rel (%p23) target = $region8
    $region5: #{tpu_custom_call.1} parent=1 // loop_body
      %s27 = ssub.s32 %s22, 1
      %s28 = ssub.s32 %s22, 2
      %s35 = sadd.s32 1, %s30
      %p36 = scmp.ge.s32.totalorder %s35, 2
      %s37 = scalar_select %p36, 0, %s35
      %s38 = sadd.s32 1, %s29
      %s39 = scalar_select %p36, %s38, %s29
      %p40 = scmp.ge.s32.totalorder %s39, 2
      %s41 = scalar_select %p40, 0, %s39
      %s42 = ssub.s32 %s29, %s41
      %s43 = ssub.s32 %s30, %s37
      %s44 = sor.u32 %s42, %s43
      %p45 = scmp.eq.s32.totalorder %s44, 0
      %s47 = sadd.s32 %s46, 1
      %s48 = scalar_select %p45, %s46, %s47
      %p51 = pneg %p45
      %p52 = scmp.eq.s32.totalorder %s22, 3
      %p53 = por %p51, %p52
      %p54 = scmp.ne.s32.totalorder %s46, %s49
      %p55 = scmp.eq.s32.totalorder %s22, 0
      %p56 = por %p54, %p55
      %p57 = scmp.ne.s32.totalorder %s46, %s49
      %p58 = scmp.eq.s32.totalorder %s27, 3
      %p59 = por %p57, %p58
      %p60 = scmp.ne.s32.totalorder %s49, %s50
      %p61 = scmp.eq.s32.totalorder %s27, 0
      %p62 = por %p60, %p61
      %p63 = scmp.ne.s32.totalorder %s49, %s50
      %p64 = scmp.eq.s32.totalorder %s28, 3
      %p65 = por %p63, %p64
      %p67 = scmp.ne.s32.totalorder %s50, %s66
      %p68 = scmp.eq.s32.totalorder %s28, 0
      %p69 = por %p67, %p68
      %s70 = ssub.s32 %s29, %s41
      %s71 = ssub.s32 %s30, %s37
      %s72 = sor.u32 %s70, %s71
      %p73 = scmp.eq.s32.totalorder %s72, 0
      %s75 = sadd.s32 %s74, 1
      %s76 = scalar_select %p73, %s74, %s75
      %p79 = pneg %p73
      %p80 = scmp.eq.s32.totalorder %s22, 3
      %p81 = por %p79, %p80
      %p82 = scmp.ne.s32.totalorder %s74, %s77
      %p83 = scmp.eq.s32.totalorder %s22, 0
      %p84 = por %p82, %p83
      %p85 = scmp.ne.s32.totalorder %s74, %s77
      %p86 = scmp.eq.s32.totalorder %s27, 3
      %p87 = por %p85, %p86
      %p88 = scmp.ne.s32.totalorder %s77, %s78
      %p89 = scmp.eq.s32.totalorder %s27, 0
      %p90 = por %p88, %p89
      %p91 = scmp.ne.s32.totalorder %s77, %s78
      %p92 = scmp.eq.s32.totalorder %s28, 3
      %p93 = por %p91, %p92
      %p95 = scmp.ne.s32.totalorder %s78, %s94
      %p96 = scmp.eq.s32.totalorder %s28, 0
      %p97 = por %p95, %p96
      %s98 = ssub.s32 %s29, %s41
      %s99 = ssub.s32 %s30, %s37
      %s100 = sor.u32 %s98, %s99
      %p101 = scmp.eq.s32.totalorder %s100, 0
      %s103 = sadd.s32 %s102, 1
      %s104 = scalar_select %p101, %s102, %s103
      %p107 = pneg %p101
      %p108 = scmp.eq.s32.totalorder %s22, 3
      %p109 = por %p107, %p108
      %p110 = scmp.ne.s32.totalorder %s102, %s105
      %p111 = scmp.eq.s32.totalorder %s22, 0
      %p112 = por %p110, %p111
      %p113 = scmp.ne.s32.totalorder %s102, %s105
      %p114 = scmp.eq.s32.totalorder %s27, 3
      %p115 = por %p113, %p114
      %p116 = scmp.ne.s32.totalorder %s105, %s106
      %p117 = scmp.eq.s32.totalorder %s27, 0
      %p118 = por %p116, %p117
      %p119 = scmp.ne.s32.totalorder %s105, %s106
      %p120 = scmp.eq.s32.totalorder %s28, 3
      %p121 = por %p119, %p120
      %p123 = scmp.ne.s32.totalorder %s106, %s122
      %p124 = scmp.eq.s32.totalorder %s28, 0
      %p125 = por %p123, %p124
      %p126 = scmp.le.s32.totalorder 1, %s22
      %p127 = scmp.lt.s32.totalorder %s22, 5
      %p128 = pnand %p126, %p127
      %p129 = pneg %p128
      // Predicated region
      $region9: #{tpu_custom_call.1} parent=5 // pred_check
        _
      $region10: #{tpu_custom_call.1} parent=5 // pred_check_branch
        %131 = sbr.rel (%p128) target = $region12
      $region11: #{tpu_custom_call.1} parent=5 // pred_region
        %s132 = ssub.s32 %s22, 1
      $region12: #{tpu_custom_call.1} parent=5 // pred_fallthru
        _
      %p133 = scmp.lt.s32.totalorder %s22, 4
      // Predicated region
      $region13: #{tpu_custom_call.1} parent=5 // pred_check
        %p134 = pneg %p133
      $region14: #{tpu_custom_call.1} parent=5 // pred_check_branch
        %136 = sbr.rel (%p134) target = $region16
      $region15: #{tpu_custom_call.1} parent=5 // pred_region
        // Predicated region
        $region17: #{tpu_custom_call.1} parent=15 // pred_check
          %p137 = pneg %p56
        $region18: #{tpu_custom_call.1} parent=15 // pred_check_branch
          %139 = sbr.rel (%p137) target = $region20
        $region19: #{tpu_custom_call.1} parent=15 // pred_region
          %s140 = sand.u32 %s46, 1
          %s141 = scalar_lea.sflag [#allocation5], %s140
          %s142 = sand.u32 %s46, 1
          %s143 = smul.addr %s142, 8
          %s144 = scalar_lea.vmem [#allocation4], %s143
          %s146 = ssub.s32 128, 128
          %147 = vsyncadd %s141, %s146
          %s148 = smul.addr %s29, 2
          %s149 = sadd.s32 %s30, %s148
          %s150 = smul.addr %s149, 128
          %s151 = scalar_lea.hbm %s1, %s150
          %s153 = sshll.u32 %s144, 4
          %s154 = int_to_ptr.vmem [resolvable:$true] %s153
          %156 = dma.hbm_to_vmem [thread:$0]  %s151, 128, %s154, %s141
        $region20: #{tpu_custom_call.1} parent=15 // pred_fallthru
          _
        // Predicated region
        $region21: #{tpu_custom_call.1} parent=15 // pred_check
          %p157 = pneg %p84
        $region22: #{tpu_custom_call.1} parent=15 // pred_check_branch
          %159 = sbr.rel (%p157) target = $region24
        $region23: #{tpu_custom_call.1} parent=15 // pred_region
          %s160 = sand.u32 %s74, 1
          %s161 = scalar_lea.sflag [#allocation8], %s160
          %s162 = sand.u32 %s74, 1
          %s163 = smul.addr %s162, 8
          %s164 = scalar_lea.vmem [#allocation7], %s163
          %s166 = ssub.s32 128, 128
          %167 = vsyncadd %s161, %s166
          %s168 = smul.addr %s29, 2
          %s169 = sadd.s32 %s30, %s168
          %s170 = smul.addr %s169, 128
          %s171 = scalar_lea.hbm %s2, %s170
          %s173 = sshll.u32 %s164, 4
          %s174 = int_to_ptr.vmem [resolvable:$true] %s173
          %176 = dma.hbm_to_vmem [thread:$0]  %s171, 128, %s174, %s161
        $region24: #{tpu_custom_call.1} parent=15 // pred_fallthru
          _
      $region16: #{tpu_custom_call.1} parent=5 // pred_fallthru
        _
      %p177 = scmp.le.s32.totalorder 1, %s22
      %p178 = scmp.lt.s32.totalorder %s22, 5
      %p179 = pnand %p177, %p178
      %p180 = pneg %p179
      // Predicated region
      $region25: #{tpu_custom_call.1} parent=5 // pred_check
        _
      $region26: #{tpu_custom_call.1} parent=5 // pred_check_branch
        %182 = sbr.rel (%p179) target = $region28
      $region27: #{tpu_custom_call.1} parent=5 // pred_region
        %s183 = ssub.s32 %s22, 1
        %s184 = sand.u32 %s49, 1
        %s185 = scalar_lea.sflag [#allocation5], %s184
        %s186 = sand.u32 %s49, 1
        %s187 = smul.addr %s186, 8
        %s188 = scalar_lea.vmem [#allocation4], %s187
        // Predicated region
        $region29: #{tpu_custom_call.1} parent=27 // pred_check
          %p189 = pneg %p62
        $region30: #{tpu_custom_call.1} parent=27 // pred_check_branch
          %191 = sbr.rel (%p189) target = $region32
        $region31: #{tpu_custom_call.1} parent=27 // pred_region
          %192 = dma.done %s185, 128
        $region32: #{tpu_custom_call.1} parent=27 // pred_fallthru
          _
        %s193 = sand.u32 %s77, 1
        %s194 = scalar_lea.sflag [#allocation8], %s193
        %s195 = sand.u32 %s77, 1
        %s196 = smul.addr %s195, 8
        %s197 = scalar_lea.vmem [#allocation7], %s196
        // Predicated region
        $region33: #{tpu_custom_call.1} parent=27 // pred_check
          %p198 = pneg %p90
        $region34: #{tpu_custom_call.1} parent=27 // pred_check_branch
          %200 = sbr.rel (%p198) target = $region36
        $region35: #{tpu_custom_call.1} parent=27 // pred_region
          %201 = dma.done %s194, 128
        $region36: #{tpu_custom_call.1} parent=27 // pred_fallthru
          _
        %s202 = sand.u32 %s49, 1
        %s203 = scalar_lea.sflag [#allocation5], %s202
        %s204 = sand.u32 %s49, 1
        %s205 = smul.addr %s204, 8
        %s206 = scalar_lea.vmem [#allocation4], %s205
        %p207 = pneg %p62
        %p208 = pneg %p59
        %s209 = sand.u32 %s77, 1
        %s210 = scalar_lea.sflag [#allocation8], %s209
        %s211 = sand.u32 %s77, 1
        %s212 = smul.addr %s211, 8
        %s213 = scalar_lea.vmem [#allocation7], %s212
        %p214 = pneg %p90
        %p215 = pneg %p87
        %p216 = pneg %p118
        %p217 = pneg %p115
        %s218 = sand.u32 %s105, 1
        %s219 = scalar_lea.sflag [#allocation6], %s218
        %s220 = sand.u32 %s105, 1
        %s221 = smul.addr %s220, 8
        %s222 = scalar_lea.vmem [#allocation9], %s221
        %v223 = vld [vmem:[%s188] sm:$0xff]
        %v224 = vld [vmem:[%s197] sm:$0xff]
        %vm225 = vcmp.ne.f32.partialorder %v224, -1.0
        %v226 = vsel %vm225, %v223, 0.0
        %v227 = vsel %vm225, %v224, 0.0
        %v228 = vand.u32 2147483647, %v226
        %v229 = vsub.f32 0.0, %v228
        %v230 = vmul.f32 %v229, 1.442695
        %v231 = vpow.pop %v230
        %v232 = vadd.f32 %v231, 1.0
        %v233 = vrcp.pop %v232
        %v234 = vmul.f32 1.0, %v233
        %v235 = vmax.f32 %v226, 0.0
        %v236 = vmul.f32 %v226, %v227
        %v237 = vsub.f32 %v235, %v236
        %v238 = vlog2.pop %v232
        %v239 = vmul.f32 %v238, 0.6931472
        %v240 = vadd.f32 %v237, %v239
        %vm241 = vcmp.ge.f32.partialorder %v226, 0.0
        %v242 = vmul.f32 %v231, %v234
        %v243 = vsel %vm241, %v234, %v242
        %v244 = vlaneseq
        %v245 = vshrl.u32 %v244, 7
        %v246 = vmul.u32 %v245, 128
        %v247 = vlaneseq
        %v248 = vand.u32 %v247, 127
        %v249 = vadd.s32 %v246, %v248
        %vm250 = vcmp.lt.s32.totalorder %v249, 1001
        %v251 = vsel %vm250, %v243, 0.0
        %v252 = vmul.f32 %v251, %v227
        %vm253 = vcmask 64512
        %v255 = vsel %vm253, 1.0, 0
        %257 = vmatprep.subr.mxu0 0.0
        %258 = vmatpush1.msra.mxu0 %v252
        %259 = vmatprep.subr.mxu0 0.0
        %260 = vmatpush1.msra.mxu0 0.0
        %261 = vmatprep.subr.mxu0 0.0
        %262 = vmatpush1.msra.mxu0 0.0
        %263 = vmatprep.subr.mxu0 0.0
        %264 = vmatpush1.msra.mxu0 0.0
        %265 = vmatprep.subr.mxu0 0.0
        %266 = vmatpush1.msra.mxu0 0.0
        %267 = vmatprep.subr.mxu0 0.0
        %268 = vmatpush1.msra.mxu0 0.0
        %269 = vmatprep.subr.mxu0 0.0
        %270 = vmatpush1.msra.mxu0 0.0
        %271 = vmatprep.subr.mxu0 0.0
        %272 = vmatpush1.msra.mxu0 0.0
        %273 = vmatprep.subr.mxu0 0.0
        %274 = vmatpush1.msra.mxu0 0.0
        %275 = vmatprep.subr.mxu0 0.0
        %276 = vmatpush1.msra.mxu0 0.0
        %277 = vmatprep.subr.mxu0 0.0
        %278 = vmatpush1.msra.mxu0 0.0
        %279 = vmatprep.subr.mxu0 0.0
        %280 = vmatpush1.msra.mxu0 0.0
        %281 = vmatprep.subr.mxu0 0.0
        %282 = vmatpush1.msra.mxu0 0.0
        %283 = vmatprep.subr.mxu0 0.0
        %284 = vmatpush1.msra.mxu0 0.0
        %285 = vmatprep.subr.mxu0 0.0
        %286 = vmatpush1.msra.mxu0 0.0
        %287 = vmatprep.subr.mxu0 0.0
        %288 = vmatpush1.msra.mxu0 0.0
        %289 = vmatprep.subr.mxu0 0.0
        %290 = vmatpush1.msra.mxu0 0.0
        %291 = vmatprep.subr.mxu0 0.0
        %292 = vmatpush1.msra.mxu0 0.0
        %293 = vmatprep.subr.mxu0 0.0
        %294 = vmatpush1.msra.mxu0 0.0
        %295 = vmatprep.subr.mxu0 0.0
        %296 = vmatpush1.msra.mxu0 0.0
        %297 = vmatprep.subr.mxu0 0.0
        %298 = vmatpush1.msra.mxu0 0.0
        %299 = vmatprep.subr.mxu0 0.0
        %300 = vmatpush1.msra.mxu0 0.0
        %301 = vmatprep.subr.mxu0 0.0
        %302 = vmatpush1.msra.mxu0 0.0
        %303 = vmatprep.subr.mxu0 0.0
        %304 = vmatpush1.msra.mxu0 0.0
        %305 = vmatprep.subr.mxu0 0.0
        %306 = vmatpush1.msra.mxu0 0.0
        %307 = vmatprep.subr.mxu0 0.0
        %308 = vmatpush1.msra.mxu0 0.0
        %309 = vmatprep.subr.mxu0 0.0
        %310 = vmatpush1.msra.mxu0 0.0
        %311 = vmatprep.subr.mxu0 0.0
        %312 = vmatpush1.msra.mxu0 0.0
        %313 = vmatprep.subr.mxu0 0.0
        %314 = vmatpush1.msra.mxu0 0.0
        %315 = vmatprep.subr.mxu0 0.0
        %316 = vmatpush1.msra.mxu0 0.0
        %317 = vmatprep.subr.mxu0 0.0
        %318 = vmatpush1.msra.mxu0 0.0
        %319 = vmatprep.subr.mxu0 0.0
        %320 = vmatpush1.msra.mxu0 0.0
        %321 = vmatprep.mubr.f32.mxu0 0.0
        %322 = vmatmul.mubr.f32.gmra.mrb[0].mxu0 %v255
        %v323 = vpop.f32.mrb[0].mxu0
        %v324 = vadd.f32 0.0, %v323
        %v325 = vpop.f32.mrb[0].mxu0
        %326 = vdwg.mxu0
        %v327 = vmul.f32 %v251, %v251
        %328 = vmatprep.subr.mxu0 0.0
        %329 = vmatpush1.msra.mxu0 %v327
        %330 = vmatprep.subr.mxu0 0.0
        %331 = vmatpush1.msra.mxu0 0.0
        %332 = vmatprep.subr.mxu0 0.0
        %333 = vmatpush1.msra.mxu0 0.0
        %334 = vmatprep.subr.mxu0 0.0
        %335 = vmatpush1.msra.mxu0 0.0
        %336 = vmatprep.subr.mxu0 0.0
        %337 = vmatpush1.msra.mxu0 0.0
        %338 = vmatprep.subr.mxu0 0.0
        %339 = vmatpush1.msra.mxu0 0.0
        %340 = vmatprep.subr.mxu0 0.0
        %341 = vmatpush1.msra.mxu0 0.0
        %342 = vmatprep.subr.mxu0 0.0
        %343 = vmatpush1.msra.mxu0 0.0
        %344 = vmatprep.subr.mxu0 0.0
        %345 = vmatpush1.msra.mxu0 0.0
        %346 = vmatprep.subr.mxu0 0.0
        %347 = vmatpush1.msra.mxu0 0.0
        %348 = vmatprep.subr.mxu0 0.0
        %349 = vmatpush1.msra.mxu0 0.0
        %350 = vmatprep.subr.mxu0 0.0
        %351 = vmatpush1.msra.mxu0 0.0
        %352 = vmatprep.subr.mxu0 0.0
        %353 = vmatpush1.msra.mxu0 0.0
        %354 = vmatprep.subr.mxu0 0.0
        %355 = vmatpush1.msra.mxu0 0.0
        %356 = vmatprep.subr.mxu0 0.0
        %357 = vmatpush1.msra.mxu0 0.0
        %358 = vmatprep.subr.mxu0 0.0
        %359 = vmatpush1.msra.mxu0 0.0
        %360 = vmatprep.subr.mxu0 0.0
        %361 = vmatpush1.msra.mxu0 0.0
        %362 = vmatprep.subr.mxu0 0.0
        %363 = vmatpush1.msra.mxu0 0.0
        %364 = vmatprep.subr.mxu0 0.0
        %365 = vmatpush1.msra.mxu0 0.0
        %366 = vmatprep.subr.mxu0 0.0
        %367 = vmatpush1.msra.mxu0 0.0
        %368 = vmatprep.subr.mxu0 0.0
        %369 = vmatpush1.msra.mxu0 0.0
        %370 = vmatprep.subr.mxu0 0.0
        %371 = vmatpush1.msra.mxu0 0.0
        %372 = vmatprep.subr.mxu0 0.0
        %373 = vmatpush1.msra.mxu0 0.0
        %374 = vmatprep.subr.mxu0 0.0
        %375 = vmatpush1.msra.mxu0 0.0
        %376 = vmatprep.subr.mxu0 0.0
        %377 = vmatpush1.msra.mxu0 0.0
        %378 = vmatprep.subr.mxu0 0.0
        %379 = vmatpush1.msra.mxu0 0.0
        %380 = vmatprep.subr.mxu0 0.0
        %381 = vmatpush1.msra.mxu0 0.0
        %382 = vmatprep.subr.mxu0 0.0
        %383 = vmatpush1.msra.mxu0 0.0
        %384 = vmatprep.subr.mxu0 0.0
        %385 = vmatpush1.msra.mxu0 0.0
        %386 = vmatprep.subr.mxu0 0.0
        %387 = vmatpush1.msra.mxu0 0.0
        %388 = vmatprep.subr.mxu0 0.0
        %389 = vmatpush1.msra.mxu0 0.0
        %390 = vmatprep.subr.mxu0 0.0
        %391 = vmatpush1.msra.mxu0 0.0
        %392 = vmatprep.mubr.f32.mxu0 0.0
        %393 = vmatmul.mubr.f32.gmra.mrb[0].mxu0 %v255
        %v394 = vpop.f32.mrb[0].mxu0
        %v395 = vadd.f32 0.0, %v394
        %v396 = vpop.f32.mrb[0].mxu0
        %397 = vdwg.mxu0
        %v398 = vmul.f32 %v227, %v227
        %399 = vmatprep.subr.mxu0 0.0
        %400 = vmatpush1.msra.mxu0 %v398
        %401 = vmatprep.subr.mxu0 0.0
        %402 = vmatpush1.msra.mxu0 0.0
        %403 = vmatprep.subr.mxu0 0.0
        %404 = vmatpush1.msra.mxu0 0.0
        %405 = vmatprep.subr.mxu0 0.0
        %406 = vmatpush1.msra.mxu0 0.0
        %407 = vmatprep.subr.mxu0 0.0
        %408 = vmatpush1.msra.mxu0 0.0
        %409 = vmatprep.subr.mxu0 0.0
        %410 = vmatpush1.msra.mxu0 0.0
        %411 = vmatprep.subr.mxu0 0.0
        %412 = vmatpush1.msra.mxu0 0.0
        %413 = vmatprep.subr.mxu0 0.0
        %414 = vmatpush1.msra.mxu0 0.0
        %415 = vmatprep.subr.mxu0 0.0
        %416 = vmatpush1.msra.mxu0 0.0
        %417 = vmatprep.subr.mxu0 0.0
        %418 = vmatpush1.msra.mxu0 0.0
        %419 = vmatprep.subr.mxu0 0.0
        %420 = vmatpush1.msra.mxu0 0.0
        %421 = vmatprep.subr.mxu0 0.0
        %422 = vmatpush1.msra.mxu0 0.0
        %423 = vmatprep.subr.mxu0 0.0
        %424 = vmatpush1.msra.mxu0 0.0
        %425 = vmatprep.subr.mxu0 0.0
        %426 = vmatpush1.msra.mxu0 0.0
        %427 = vmatprep.subr.mxu0 0.0
        %428 = vmatpush1.msra.mxu0 0.0
        %429 = vmatprep.subr.mxu0 0.0
        %430 = vmatpush1.msra.mxu0 0.0
        %431 = vmatprep.subr.mxu0 0.0
        %432 = vmatpush1.msra.mxu0 0.0
        %433 = vmatprep.subr.mxu0 0.0
        %434 = vmatpush1.msra.mxu0 0.0
        %435 = vmatprep.subr.mxu0 0.0
        %436 = vmatpush1.msra.mxu0 0.0
        %437 = vmatprep.subr.mxu0 0.0
        %438 = vmatpush1.msra.mxu0 0.0
        %439 = vmatprep.subr.mxu0 0.0
        %440 = vmatpush1.msra.mxu0 0.0
        %441 = vmatprep.subr.mxu0 0.0
        %442 = vmatpush1.msra.mxu0 0.0
        %443 = vmatprep.subr.mxu0 0.0
        %444 = vmatpush1.msra.mxu0 0.0
        %445 = vmatprep.subr.mxu0 0.0
        %446 = vmatpush1.msra.mxu0 0.0
        %447 = vmatprep.subr.mxu0 0.0
        %448 = vmatpush1.msra.mxu0 0.0
        %449 = vmatprep.subr.mxu0 0.0
        %450 = vmatpush1.msra.mxu0 0.0
        %451 = vmatprep.subr.mxu0 0.0
        %452 = vmatpush1.msra.mxu0 0.0
        %453 = vmatprep.subr.mxu0 0.0
        %454 = vmatpush1.msra.mxu0 0.0
        %455 = vmatprep.subr.mxu0 0.0
        %456 = vmatpush1.msra.mxu0 0.0
        %457 = vmatprep.subr.mxu0 0.0
        %458 = vmatpush1.msra.mxu0 0.0
        %459 = vmatprep.subr.mxu0 0.0
        %460 = vmatpush1.msra.mxu0 0.0
        %461 = vmatprep.subr.mxu0 0.0
        %462 = vmatpush1.msra.mxu0 0.0
        %463 = vmatprep.mubr.f32.mxu0 0.0
        %464 = vmatmul.mubr.f32.gmra.mrb[0].mxu0 %v255
        %v465 = vpop.f32.mrb[0].mxu0
        %v466 = vadd.f32 0.0, %v465
        %v467 = vpop.f32.mrb[0].mxu0
        %468 = vdwg.mxu0
        %v469 = vmul.f32 %v227, %v240
        %s471 = sld [smem:[#allocation3 + %s32]]
        %s472 = scvt.s32.f32 %s471
        loop: start=0, step=1, limit=32
        $region37: #{tpu_custom_call.1} parent=27 // loop_pre_header
          _
        $region38: #{tpu_custom_call.1} parent=27 // loop_header
          %s474 = sphi 0, %s478
          %p475 = scmp.ge.s32.totalorder %s474, 32
          %s479 = sphi 0, %s570
          %s480 = sphi 2139095040, %s571
        $region39: #{tpu_custom_call.1} parent=27 // loop_header_branch
          %477 = sbr.rel (%p475) target = $region43
        $region40: #{tpu_custom_call.1} parent=27 // loop_body
          %s481 = ssub.s32 %s480, %s479
          %s482 = sshra.s32 %s481, 1
          %s483 = sadd.s32 %s479, %s482
          %v484 = vstv %s483
          %vm485 = vcmp.ge.s32.totalorder %v469, %v484
          %v486 = vsel %vm485, 1, 0
          %v487 = vcvt.s32.f32 %v486
          %488 = vmatprep.subr.mxu0 0.0
          %489 = vmatpush1.msra.mxu0 %v487
          %490 = vmatprep.subr.mxu0 0.0
          %491 = vmatpush1.msra.mxu0 0.0
          %492 = vmatprep.subr.mxu0 0.0
          %493 = vmatpush1.msra.mxu0 0.0
          %494 = vmatprep.subr.mxu0 0.0
          %495 = vmatpush1.msra.mxu0 0.0
          %496 = vmatprep.subr.mxu0 0.0
          %497 = vmatpush1.msra.mxu0 0.0
          %498 = vmatprep.subr.mxu0 0.0
          %499 = vmatpush1.msra.mxu0 0.0
          %500 = vmatprep.subr.mxu0 0.0
          %501 = vmatpush1.msra.mxu0 0.0
          %502 = vmatprep.subr.mxu0 0.0
          %503 = vmatpush1.msra.mxu0 0.0
          %504 = vmatprep.subr.mxu0 0.0
          %505 = vmatpush1.msra.mxu0 0.0
          %506 = vmatprep.subr.mxu0 0.0
          %507 = vmatpush1.msra.mxu0 0.0
          %508 = vmatprep.subr.mxu0 0.0
          %509 = vmatpush1.msra.mxu0 0.0
          %510 = vmatprep.subr.mxu0 0.0
          %511 = vmatpush1.msra.mxu0 0.0
          %512 = vmatprep.subr.mxu0 0.0
          %513 = vmatpush1.msra.mxu0 0.0
          %514 = vmatprep.subr.mxu0 0.0
          %515 = vmatpush1.msra.mxu0 0.0
          %516 = vmatprep.subr.mxu0 0.0
          %517 = vmatpush1.msra.mxu0 0.0
          %518 = vmatprep.subr.mxu0 0.0
          %519 = vmatpush1.msra.mxu0 0.0
          %520 = vmatprep.subr.mxu0 0.0
          %521 = vmatpush1.msra.mxu0 0.0
          %522 = vmatprep.subr.mxu0 0.0
          %523 = vmatpush1.msra.mxu0 0.0
          %524 = vmatprep.subr.mxu0 0.0
          %525 = vmatpush1.msra.mxu0 0.0
          %526 = vmatprep.subr.mxu0 0.0
          %527 = vmatpush1.msra.mxu0 0.0
          %528 = vmatprep.subr.mxu0 0.0
          %529 = vmatpush1.msra.mxu0 0.0
          %530 = vmatprep.subr.mxu0 0.0
          %531 = vmatpush1.msra.mxu0 0.0
          %532 = vmatprep.subr.mxu0 0.0
          %533 = vmatpush1.msra.mxu0 0.0
          %534 = vmatprep.subr.mxu0 0.0
          %535 = vmatpush1.msra.mxu0 0.0
          %536 = vmatprep.subr.mxu0 0.0
          %537 = vmatpush1.msra.mxu0 0.0
          %538 = vmatprep.subr.mxu0 0.0
          %539 = vmatpush1.msra.mxu0 0.0
          %540 = vmatprep.subr.mxu0 0.0
          %541 = vmatpush1.msra.mxu0 0.0
          %542 = vmatprep.subr.mxu0 0.0
          %543 = vmatpush1.msra.mxu0 0.0
          %544 = vmatprep.subr.mxu0 0.0
          %545 = vmatpush1.msra.mxu0 0.0
          %546 = vmatprep.subr.mxu0 0.0
          %547 = vmatpush1.msra.mxu0 0.0
          %548 = vmatprep.subr.mxu0 0.0
          %549 = vmatpush1.msra.mxu0 0.0
          %550 = vmatprep.subr.mxu0 0.0
          %551 = vmatpush1.msra.mxu0 0.0
          %552 = vmatprep.mubr.f32.mxu0 0.0
          %553 = vmatmul.mubr.f32.gmra.mrb[0].mxu0 %v255
          %v554 = vpop.f32.mrb[0].mxu0
          %v555 = vadd.f32 0.0, %v554
          %v556 = vpop.f32.mrb[0].mxu0
          %557 = vdwg.mxu0
          %vm558 = vcmask 1040384
          %v559 = vsel %vm558, %v555, 0.0
          %560 = vadd.xlane.f32.xlu0 %v559
          %v561 = vpop.xlane.xlu0 %560
          %v562 = vrot.slane %v561, 4
          %v563 = vadd.f32 %v561, %v562
          %v564 = vrot.slane %v563, 2
          %v565 = vadd.f32 %v563, %v564
          %v566 = vrot.slane %v565, 1
          %v567 = vadd.f32 %v565, %v566
          %s568 = vtos %v567
          %p569 = scmp.ge.f32.partialorder %s568, %s472
          %s570 = scalar_select %p569, %s483, %s479
          %s571 = scalar_select %p569, %s480, %s483
        $region41: #{tpu_custom_call.1} parent=27 // loop_footer
          %s478 = sadd.s32 1, %s474
        $region42: #{tpu_custom_call.1} parent=27 // loop_footer_branch
          %473 = sbr.rel target = $region38
        $region43: #{tpu_custom_call.1} parent=27 // loop_exit
          _
        %v572 = vstv %s479
        %vm573 = vcmp.gt.s32.totalorder %v469, %v572
        %v574 = vsel %vm573, %v469, 0.0
        %575 = vmatprep.subr.mxu0 0.0
        %576 = vmatpush1.msra.mxu0 %v574
        %577 = vmatprep.subr.mxu0 0.0
        %578 = vmatpush1.msra.mxu0 0.0
        %579 = vmatprep.subr.mxu0 0.0
        %580 = vmatpush1.msra.mxu0 0.0
        %581 = vmatprep.subr.mxu0 0.0
        %582 = vmatpush1.msra.mxu0 0.0
        %583 = vmatprep.subr.mxu0 0.0
        %584 = vmatpush1.msra.mxu0 0.0
        %585 = vmatprep.subr.mxu0 0.0
        %586 = vmatpush1.msra.mxu0 0.0
        %587 = vmatprep.subr.mxu0 0.0
        %588 = vmatpush1.msra.mxu0 0.0
        %589 = vmatprep.subr.mxu0 0.0
        %590 = vmatpush1.msra.mxu0 0.0
        %591 = vmatprep.subr.mxu0 0.0
        %592 = vmatpush1.msra.mxu0 0.0
        %593 = vmatprep.subr.mxu0 0.0
        %594 = vmatpush1.msra.mxu0 0.0
        %595 = vmatprep.subr.mxu0 0.0
        %596 = vmatpush1.msra.mxu0 0.0
        %597 = vmatprep.subr.mxu0 0.0
        %598 = vmatpush1.msra.mxu0 0.0
        %599 = vmatprep.subr.mxu0 0.0
        %600 = vmatpush1.msra.mxu0 0.0
        %601 = vmatprep.subr.mxu0 0.0
        %602 = vmatpush1.msra.mxu0 0.0
        %603 = vmatprep.subr.mxu0 0.0
        %604 = vmatpush1.msra.mxu0 0.0
        %605 = vmatprep.subr.mxu0 0.0
        %606 = vmatpush1.msra.mxu0 0.0
        %607 = vmatprep.subr.mxu0 0.0
        %608 = vmatpush1.msra.mxu0 0.0
        %609 = vmatprep.subr.mxu0 0.0
        %610 = vmatpush1.msra.mxu0 0.0
        %611 = vmatprep.subr.mxu0 0.0
        %612 = vmatpush1.msra.mxu0 0.0
        %613 = vmatprep.subr.mxu0 0.0
        %614 = vmatpush1.msra.mxu0 0.0
        %615 = vmatprep.subr.mxu0 0.0
        %616 = vmatpush1.msra.mxu0 0.0
        %617 = vmatprep.subr.mxu0 0.0
        %618 = vmatpush1.msra.mxu0 0.0
        %619 = vmatprep.subr.mxu0 0.0
        %620 = vmatpush1.msra.mxu0 0.0
        %621 = vmatprep.subr.mxu0 0.0
        %622 = vmatpush1.msra.mxu0 0.0
        %623 = vmatprep.subr.mxu0 0.0
        %624 = vmatpush1.msra.mxu0 0.0
        %625 = vmatprep.subr.mxu0 0.0
        %626 = vmatpush1.msra.mxu0 0.0
        %627 = vmatprep.subr.mxu0 0.0
        %628 = vmatpush1.msra.mxu0 0.0
        %629 = vmatprep.subr.mxu0 0.0
        %630 = vmatpush1.msra.mxu0 0.0
        %631 = vmatprep.subr.mxu0 0.0
        %632 = vmatpush1.msra.mxu0 0.0
        %633 = vmatprep.subr.mxu0 0.0
        %634 = vmatpush1.msra.mxu0 0.0
        %635 = vmatprep.subr.mxu0 0.0
        %636 = vmatpush1.msra.mxu0 0.0
        %637 = vmatprep.subr.mxu0 0.0
        %638 = vmatpush1.msra.mxu0 0.0
        %639 = vmatprep.mubr.f32.mxu0 0.0
        %640 = vmatmul.mubr.f32.gmra.mrb[0].mxu0 %v255
        %v641 = vpop.f32.mrb[0].mxu0
        %v642 = vadd.f32 0.0, %v641
        %v643 = vpop.f32.mrb[0].mxu0
        %644 = vdwg.mxu0
        %v645 = vsel %vm573, 1, 0
        %v646 = vcvt.s32.f32 %v645
        %647 = vmatprep.subr.mxu0 0.0
        %648 = vmatpush1.msra.mxu0 %v646
        %649 = vmatprep.subr.mxu0 0.0
        %650 = vmatpush1.msra.mxu0 0.0
        %651 = vmatprep.subr.mxu0 0.0
        %652 = vmatpush1.msra.mxu0 0.0
        %653 = vmatprep.subr.mxu0 0.0
        %654 = vmatpush1.msra.mxu0 0.0
        %655 = vmatprep.subr.mxu0 0.0
        %656 = vmatpush1.msra.mxu0 0.0
        %657 = vmatprep.subr.mxu0 0.0
        %658 = vmatpush1.msra.mxu0 0.0
        %659 = vmatprep.subr.mxu0 0.0
        %660 = vmatpush1.msra.mxu0 0.0
        %661 = vmatprep.subr.mxu0 0.0
        %662 = vmatpush1.msra.mxu0 0.0
        %663 = vmatprep.subr.mxu0 0.0
        %664 = vmatpush1.msra.mxu0 0.0
        %665 = vmatprep.subr.mxu0 0.0
        %666 = vmatpush1.msra.mxu0 0.0
        %667 = vmatprep.subr.mxu0 0.0
        %668 = vmatpush1.msra.mxu0 0.0
        %669 = vmatprep.subr.mxu0 0.0
        %670 = vmatpush1.msra.mxu0 0.0
        %671 = vmatprep.subr.mxu0 0.0
        %672 = vmatpush1.msra.mxu0 0.0
        %673 = vmatprep.subr.mxu0 0.0
        %674 = vmatpush1.msra.mxu0 0.0
        %675 = vmatprep.subr.mxu0 0.0
        %676 = vmatpush1.msra.mxu0 0.0
        %677 = vmatprep.subr.mxu0 0.0
        %678 = vmatpush1.msra.mxu0 0.0
        %679 = vmatprep.subr.mxu0 0.0
        %680 = vmatpush1.msra.mxu0 0.0
        %681 = vmatprep.subr.mxu0 0.0
        %682 = vmatpush1.msra.mxu0 0.0
        %683 = vmatprep.subr.mxu0 0.0
        %684 = vmatpush1.msra.mxu0 0.0
        %685 = vmatprep.subr.mxu0 0.0
        %686 = vmatpush1.msra.mxu0 0.0
        %687 = vmatprep.subr.mxu0 0.0
        %688 = vmatpush1.msra.mxu0 0.0
        %689 = vmatprep.subr.mxu0 0.0
        %690 = vmatpush1.msra.mxu0 0.0
        %691 = vmatprep.subr.mxu0 0.0
        %692 = vmatpush1.msra.mxu0 0.0
        %693 = vmatprep.subr.mxu0 0.0
        %694 = vmatpush1.msra.mxu0 0.0
        %695 = vmatprep.subr.mxu0 0.0
        %696 = vmatpush1.msra.mxu0 0.0
        %697 = vmatprep.subr.mxu0 0.0
        %698 = vmatpush1.msra.mxu0 0.0
        %699 = vmatprep.subr.mxu0 0.0
        %700 = vmatpush1.msra.mxu0 0.0
        %701 = vmatprep.subr.mxu0 0.0
        %702 = vmatpush1.msra.mxu0 0.0
        %703 = vmatprep.subr.mxu0 0.0
        %704 = vmatpush1.msra.mxu0 0.0
        %705 = vmatprep.subr.mxu0 0.0
        %706 = vmatpush1.msra.mxu0 0.0
        %707 = vmatprep.subr.mxu0 0.0
        %708 = vmatpush1.msra.mxu0 0.0
        %709 = vmatprep.subr.mxu0 0.0
        %710 = vmatpush1.msra.mxu0 0.0
        %711 = vmatprep.mubr.f32.mxu0 0.0
        %712 = vmatmul.mubr.f32.gmra.mrb[0].mxu0 %v255
        %v713 = vpop.f32.mrb[0].mxu0
        %v714 = vadd.f32 0.0, %v713
        %v715 = vpop.f32.mrb[0].mxu0
        %716 = vdwg.mxu0
        %v719 = vrot.slane %v395, 7
        %v722 = vrot.slane %v466, 6
        %v725 = vrot.slane %v642, 5
        %v728 = vrot.slane %v714, 4
        %vm730 = vcmask 1040384
        %v731 = vsel %vm730, %v324, %v719
        %vm732 = vcmask 1041408
        %v733 = vsel %vm732, %v731, %v722
        %vm734 = vcmask 1042432
        %v735 = vsel %vm734, %v733, %v725
        %vm736 = vcmask 1043456
        %v737 = vsel %vm736, %v735, %v728
        %vm738 = vcmask 1044480
        %v739 = vsel %vm738, %v737, %v572
        %vm740 = vcmask 1045504
        %v741 = vsel %vm740, %v739, 0.0
        %742 = vst [vmem:[%s222] sm:$0xff] %v741
        %s743 = sand.u32 %s105, 1
        %s744 = scalar_lea.sflag [#allocation6], %s743
        %s745 = sand.u32 %s105, 1
        %s746 = smul.addr %s745, 8
        %s747 = scalar_lea.vmem [#allocation9], %s746
        // Predicated region
        $region44: #{tpu_custom_call.1} parent=27 // pred_check
          %p748 = pneg %p115
        $region45: #{tpu_custom_call.1} parent=27 // pred_check_branch
          %750 = sbr.rel (%p748) target = $region47
        $region46: #{tpu_custom_call.1} parent=27 // pred_region
          %s752 = ssub.s32 128, 128
          %753 = vsyncadd %s744, %s752
          %s754 = smul.addr %s31, 2
          %s755 = sadd.s32 %s32, %s754
          %s756 = smul.addr %s755, 128
          %s757 = scalar_lea.hbm %s3, %s756
          %s759 = sshll.u32 %s747, 4
          %s760 = int_to_ptr.vmem [resolvable:$true] %s759
          %762 = dma.vmem_to_hbm [thread:$0]  %s760, 128, %s757, %s744
        $region47: #{tpu_custom_call.1} parent=27 // pred_fallthru
          _
      $region28: #{tpu_custom_call.1} parent=5 // pred_fallthru
        _
      %p763 = scmp.le.s32.totalorder 2, %s22
      // Predicated region
      $region48: #{tpu_custom_call.1} parent=5 // pred_check
        %p764 = pneg %p763
      $region49: #{tpu_custom_call.1} parent=5 // pred_check_branch
        %766 = sbr.rel (%p764) target = $region51
      $region50: #{tpu_custom_call.1} parent=5 // pred_region
        %s767 = ssub.s32 %s22, 2
        // Predicated region
        $region52: #{tpu_custom_call.1} parent=50 // pred_check
          %p768 = pneg %p121
        $region53: #{tpu_custom_call.1} parent=50 // pred_check_branch
          %770 = sbr.rel (%p768) target = $region55
        $region54: #{tpu_custom_call.1} parent=50 // pred_region
          %s771 = sand.u32 %s106, 1
          %s772 = scalar_lea.sflag [#allocation6], %s771
          %s773 = sand.u32 %s106, 1
          %s774 = smul.addr %s773, 8
          %s775 = scalar_lea.vmem [#allocation9], %s774
          %776 = dma.done %s772, 128
        $region55: #{tpu_custom_call.1} parent=50 // pred_fallthru
          _
      $region51: #{tpu_custom_call.1} parent=5 // pred_fallthru
        _
    $region6: #{tpu_custom_call.1} parent=1 // loop_footer
      %s26 = sadd.s32 1, %s22
    $region7: #{tpu_custom_call.1} parent=1 // loop_footer_branch
      %21 = sbr.rel target = $region3
    $region8: #{tpu_custom_call.1} parent=1 // loop_exit
      _
    %777 = vsyncpa [#allocation5], 1
    %s778 = scalar_lea.sflag [#allocation5], 1
    %779 = vsyncpa %s778, 1
    %780 = vsyncpa [#allocation8], 1
    %s781 = scalar_lea.sflag [#allocation8], 1
    %782 = vsyncpa %s781, 1
    %783 = vsyncpa [#allocation6], 1
    %s784 = scalar_lea.sflag [#allocation6], 1
    %785 = vsyncpa %s784, 1

</llo_original>
